<compile_context>
chip_gen: v6e
topology: v6e:2x2x1
jax: 0.10.0
libtpu: 0.0.40
codegen_flags: <defaults>
</compile_context>

<pallas_src>
import math
import functools

import jax
import jax.numpy as jnp
from jax import lax
from jax.experimental import pallas as pl
from jax.experimental.pallas import tpu as pltpu

BN_EPS = 1e-5
_LANE = 128
_SUBLANE = 8
_VMEM_LIMIT = 32 * 1024 * 1024  # safe on v5e/v6e/v7x; tiles sized well below this


def _round_up(x, m):
    return (x + m - 1) // m * m


# ----------------------------------------------------------------------------
# Pass 1: row-tiled conv matmul + per-tile per-channel sum / sum-of-squares.
#   grid = (grid_m,)  "parallel"
# ----------------------------------------------------------------------------
def _conv_stats_kernel(p_ref, w_ref, y_ref, stats_ref):
    # (tm, CK) @ (CK, Cout_p) -> (tm, Cout_p), f32 accumulate on the MXU.
    y = jnp.dot(p_ref[...], w_ref[...], preferred_element_type=jnp.float32)
    y_ref[...] = y
    s = jnp.sum(y, axis=0, keepdims=True)          # (1, Cout_p)
    ss = jnp.sum(y * y, axis=0, keepdims=True)     # (1, Cout_p)
    pad = jnp.zeros((_SUBLANE - 2, y.shape[1]), jnp.float32)
    stats_ref[...] = jnp.concatenate([s, ss, pad], axis=0)   # (8, Cout_p)


# ----------------------------------------------------------------------------
# Pass 2: row-tiled fused BatchNorm apply (precomputed scale/shift) + ReLU.
#   grid = (grid_m,)  "parallel"
# ----------------------------------------------------------------------------
def _bn_relu_kernel(y_ref, scale_ref, shift_ref, o_ref):
    y = y_ref[...] * scale_ref[...] + shift_ref[...]
    o_ref[...] = jnp.maximum(y, 0.0).astype(o_ref.dtype)


# ----------------------------------------------------------------------------
# Wrapper: NCHW in / NCHW out, matching the PyTorch module's forward().
# ----------------------------------------------------------------------------
def aspp_module_forward(x_nchw, weight_oihw, gamma, beta, *, padding, dilation,
                        tm=512, compute_dtype=None):
    N, Cin, H, W = x_nchw.shape
    Cout, Cin_w, K, Kw = weight_oihw.shape
    assert Cin == Cin_w and K == Kw
    if compute_dtype is None:
        compute_dtype = x_nchw.dtype

    H_out = H + 2 * padding - dilation * (K - 1)
    W_out = W + 2 * padding - dilation * (K - 1)
    assert H_out > 0 and W_out > 0
    NHW = N * H_out * W_out
    CK = Cin * K * K

    tm = max(_SUBLANE, _round_up(tm, _SUBLANE))
    M_pad = _round_up(NHW, tm)
    grid_m = M_pad // tm
    Cout_p = _round_up(Cout, _LANE)

    # --- glue: im2col with taps folded into the contraction dim -----------
    x_nhwc = jnp.transpose(x_nchw, (0, 2, 3, 1))                      # (N,H,W,Cin)
    x_pad = jnp.pad(
        x_nhwc, ((0, 0), (padding, padding), (padding, padding), (0, 0)))
    cols = []
    for kh in range(K):
        for kw in range(K):
            cols.append(x_pad[:, kh * dilation: kh * dilation + H_out,
                                 kw * dilation: kw * dilation + W_out, :])
    patches = jnp.concatenate(cols, axis=-1).reshape(NHW, CK)         # (NHW, CK)
    patches = jnp.pad(patches, ((0, M_pad - NHW), (0, 0)))            # zero rows
    patches = patches.astype(compute_dtype)

    # Weight in (kh, kw, ci) contraction order to match the patch layout;
    # lane-pad Cout to a multiple of 128.
    w2d = jnp.transpose(weight_oihw, (2, 3, 1, 0)).reshape(CK, Cout)
    w2d = jnp.pad(w2d, ((0, 0), (0, Cout_p - Cout))).astype(compute_dtype)

    # --- pass 1: conv row tiles + per-tile channel sum / sumsq -------------
    itemsize = jnp.dtype(compute_dtype).itemsize
    bytes_accessed = (M_pad * CK * itemsize + CK * Cout_p * itemsize
                      + M_pad * Cout_p * 4 + grid_m * _SUBLANE * Cout_p * 4)
    y_flat, stats = pl.pallas_call(
        _conv_stats_kernel,
        out_shape=(
            jax.ShapeDtypeStruct((M_pad, Cout_p), jnp.float32),
            jax.ShapeDtypeStruct((grid_m * _SUBLANE, Cout_p), jnp.float32),
        ),
        grid_spec=pltpu.PrefetchScalarGridSpec(
            num_scalar_prefetch=0,
            grid=(grid_m,),
            in_specs=[
                pl.BlockSpec((tm, CK), lambda m: (m, 0)),
                pl.BlockSpec((CK, Cout_p), lambda m: (0, 0)),   # resident weight
            ],
            out_specs=[
                pl.BlockSpec((tm, Cout_p), lambda m: (m, 0)),
                pl.BlockSpec((_SUBLANE, Cout_p), lambda m: (m, 0)),
            ],
        ),
        compiler_params=pltpu.CompilerParams(
            dimension_semantics=("parallel",),
            vmem_limit_bytes=_VMEM_LIMIT,
        ),
        cost_estimate=pl.CostEstimate(
            flops=2 * M_pad * CK * Cout_p,
            transcendentals=0,
            bytes_accessed=bytes_accessed,
        ),
    )(patches, w2d)

    # --- tiny cross-tile stats combine (f32, plain JAX) --------------------
    # Zero-padded rows / channels contribute exactly 0 to both sums, so
    # dividing by the real element count NHW gives the correct batch stats.
    stats = stats.reshape(grid_m, _SUBLANE, Cout_p)
    ch_sum = jnp.sum(stats[:, 0, :], axis=0)            # (Cout_p,)
    ch_sumsq = jnp.sum(stats[:, 1, :], axis=0)          # (Cout_p,)
    mean = ch_sum / NHW
    var = jnp.maximum(ch_sumsq / NHW - mean * mean, 0.0)
    gamma_p = jnp.pad(gamma.astype(jnp.float32), (0, Cout_p - Cout))
    beta_p = jnp.pad(beta.astype(jnp.float32), (0, Cout_p - Cout))
    scale = (gamma_p * lax.rsqrt(var + BN_EPS)).reshape(1, Cout_p)
    shift = (beta_p - mean * gamma_p * lax.rsqrt(var + BN_EPS)).reshape(1, Cout_p)

    # --- pass 2: fused BN apply + ReLU, row tiled ---------------------------
    out_flat = pl.pallas_call(
        _bn_relu_kernel,
        out_shape=jax.ShapeDtypeStruct((M_pad, Cout_p), x_nchw.dtype),
        grid_spec=pltpu.PrefetchScalarGridSpec(
            num_scalar_prefetch=0,
            grid=(grid_m,),
            in_specs=[
                pl.BlockSpec((tm, Cout_p), lambda m: (m, 0)),
                pl.BlockSpec((1, Cout_p), lambda m: (0, 0)),    # resident scale
                pl.BlockSpec((1, Cout_p), lambda m: (0, 0)),    # resident shift
            ],
            out_specs=pl.BlockSpec((tm, Cout_p), lambda m: (m, 0)),
        ),
        compiler_params=pltpu.CompilerParams(
            dimension_semantics=("parallel",),
            vmem_limit_bytes=_VMEM_LIMIT,
        ),
    )(y_flat, scale, shift)

    # (M_pad, Cout_p) -> (N, H_out, W_out, Cout) -> NCHW (PyTorch convention).
    out = out_flat[:NHW, :Cout].reshape(N, H_out, W_out, Cout)
    return jnp.transpose(out, (0, 3, 1, 2))


# ----------------------------------------------------------------------------
# Pure-JAX reference (lax conv + training-mode BN + ReLU) for validation.
# ----------------------------------------------------------------------------
def aspp_module_ref(x_nchw, weight_oihw, gamma, beta, *, padding, dilation):
    y = lax.conv_general_dilated(
        x_nchw, weight_oihw,
        window_strides=(1, 1),
        padding=[(padding, padding), (padding, padding)],
        rhs_dilation=(dilation, dilation),
        dimension_numbers=("NCHW", "OIHW", "NCHW"),
    )
    mean = jnp.mean(y, axis=(0, 2, 3), keepdims=True)
    var = jnp.mean((y - mean) ** 2, axis=(0, 2, 3), keepdims=True)
    y = (y - mean) * lax.rsqrt(var + BN_EPS)
    y = y * gamma.reshape(1, -1, 1, 1) + beta.reshape(1, -1, 1, 1)
    return jnp.maximum(y, 0.0)


if __name__ == "__main__":
    # Small ASPP branch: inplanes=4, planes=8, kernel_size=3, padding=2, dilation=2
    N, Cin, H, W = 2, 4, 16, 16
    Cout, K = 8, 3
    padding, dilation = 2, 2

    key = jax.random.PRNGKey(0)
    kx, kw = jax.random.split(key)

    x = jax.random.normal(kx, (N, Cin, H, W), dtype=jnp.float32)

    # kaiming_normal_ (fan_in, a=0): std = sqrt(2 / (Cin*K*K))
    fan_in = Cin * K * K
    weight = jax.random.normal(kw, (Cout, Cin, K, K), dtype=jnp.float32) * \
        math.sqrt(2.0 / fan_in)

    # BatchNorm init per _init_weight: weight (gamma) = 1, bias (beta) = 0
    gamma = jnp.ones((Cout,), dtype=jnp.float32)
    beta = jnp.zeros((Cout,), dtype=jnp.float32)

    ref = aspp_module_ref(x, weight, gamma, beta,
                          padding=padding, dilation=dilation)

    # f32 compute path: tight check against the reference.
    fwd = jax.jit(functools.partial(
        aspp_module_forward, padding=padding, dilation=dilation, tm=256))
    out = jax.block_until_ready(fwd(x, weight, gamma, beta))
    assert out.shape == ref.shape == (N, Cout, H, W)
    err32 = float(jnp.max(jnp.abs(out - ref)))
    assert jnp.allclose(out, ref, rtol=1e-3, atol=1e-3), err32

    # bf16 compute path (halved tap DMA bytes, 2x MXU throughput): loose check.
    fwd_bf16 = jax.jit(functools.partial(
        aspp_module_forward, padding=padding, dilation=dilation, tm=256,
        compute_dtype=jnp.bfloat16))
    out_bf16 = jax.block_until_ready(fwd_bf16(x, weight, gamma, beta))
    err16 = float(jnp.max(jnp.abs(out_bf16 - ref)))
    assert jnp.allclose(out_bf16, ref, rtol=0.1, atol=0.1), err16

    print("KERNEL_OK")
</pallas_src>

<mosaic_0001>
module attributes {stable_mosaic.version = 11 : i64} {
  func.func @_conv_stats_kernel(%arg0: i32, %arg1: memref<256x36xf32, #tpu.memory_space<vmem>>, %arg2: memref<36x128xf32, #tpu.memory_space<vmem>>, %arg3: memref<256x128xf32, #tpu.memory_space<vmem>>, %arg4: memref<8x128xf32, #tpu.memory_space<vmem>>) attributes {dimension_semantics = [#tpu.dimension_semantics<parallel>], iteration_bounds = array<i64: 2>, scalar_prefetch = 0 : i64, scratch_operands = 0 : i64, tpu.core_type = #tpu.core_type<tc>, window_params = [{transform_indices = @transform_0, window_bounds = array<i64: 256, 36>}, {pipeline_mode = #tpu.pipeline_mode<synchronous>, transform_indices = @transform_1, window_bounds = array<i64: 36, 128>}, {transform_indices = @transform_2, window_bounds = array<i64: 256, 128>}, {transform_indices = @transform_3, window_bounds = array<i64: 8, 128>}]} {
    %c0 = arith.constant 0 : index
    %c0_0 = arith.constant 0 : index
    %0 = vector.load %arg1[%c0, %c0_0] : memref<256x36xf32, #tpu.memory_space<vmem>>, vector<256x36xf32>
    %c0_1 = arith.constant 0 : index
    %c0_2 = arith.constant 0 : index
    %1 = vector.load %arg2[%c0_1, %c0_2] : memref<36x128xf32, #tpu.memory_space<vmem>>, vector<36x128xf32>
    %cst = arith.constant dense<0.000000e+00> : vector<256x128xf32>
    %2 = tpu.matmul %0, %1, %cst {dimension_numbers = #tpu.dot_dimension_numbers<[1], [0], [0], [1], [0, 0, 1, 1], [], []>} : vector<256x36xf32>, vector<36x128xf32>, vector<256x128xf32> -> vector<256x128xf32>
    %c0_3 = arith.constant 0 : index
    %c0_4 = arith.constant 0 : index
    %3 = vector.load %arg3[%c0_3, %c0_4] : memref<256x128xf32, #tpu.memory_space<vmem>>, vector<256x128xf32>
    tpu.vector_store %arg3[%c0_3, %c0_4], %2 {strides = array<i32>} : memref<256x128xf32, #tpu.memory_space<vmem>>, vector<256x128xf32>,
    %cst_5 = arith.constant dense<0.000000e+00> : vector<128xf32>
    %4 = vector.multi_reduction <add>, %2, %cst_5 [0] : vector<256x128xf32> to vector<128xf32>
    %5 = vector.shape_cast %4 : vector<128xf32> to vector<1x128xf32>
    %6 = arith.mulf %2, %2 : vector<256x128xf32>
    %cst_6 = arith.constant dense<0.000000e+00> : vector<128xf32>
    %7 = vector.multi_reduction <add>, %6, %cst_6 [0] : vector<256x128xf32> to vector<128xf32>
    %8 = vector.shape_cast %7 : vector<128xf32> to vector<1x128xf32>
    %cst_7 = arith.constant 0.000000e+00 : f32
    %9 = vector.broadcast %cst_7 : f32 to vector<6x128xf32>
    %10 = tpu.concatenate %5, %8, %9 in 0 : vector<1x128xf32>, vector<1x128xf32>, vector<6x128xf32> -> vector<8x128xf32>
    %c0_8 = arith.constant 0 : index
    %c0_9 = arith.constant 0 : index
    %11 = vector.load %arg4[%c0_8, %c0_9] : memref<8x128xf32, #tpu.memory_space<vmem>>, vector<8x128xf32>
    tpu.vector_store %arg4[%c0_8, %c0_9], %10 {strides = array<i32>} : memref<8x128xf32, #tpu.memory_space<vmem>>, vector<8x128xf32>,
    return
  }
  func.func @transform_0(%arg0: i32) -> (i32, i32) {
    %c0_i32 = arith.constant 0 : i32
    %c0_i32_0 = arith.constant 0 : i32
    return %arg0, %c0_i32 : i32, i32
  }
  func.func @transform_1(%arg0: i32) -> (i32, i32) {
    %c0_i32 = arith.constant 0 : i32
    %c0_i32_0 = arith.constant 0 : i32
    %c0_i32_1 = arith.constant 0 : i32
    return %c0_i32, %c0_i32_0 : i32, i32
  }
  func.func @transform_2(%arg0: i32) -> (i32, i32) {
    %c0_i32 = arith.constant 0 : i32
    %c0_i32_0 = arith.constant 0 : i32
    return %arg0, %c0_i32 : i32, i32
  }
  func.func @transform_3(%arg0: i32) -> (i32, i32) {
    %c0_i32 = arith.constant 0 : i32
    %c0_i32_0 = arith.constant 0 : i32
    return %arg0, %c0_i32 : i32, i32
  }
}

module attributes {stable_mosaic.version = 11 : i64} {
  func.func @_bn_relu_kernel(%arg0: i32, %arg1: memref<256x128xf32, #tpu.memory_space<vmem>>, %arg2: memref<1x128xf32, #tpu.memory_space<vmem>>, %arg3: memref<1x128xf32, #tpu.memory_space<vmem>>, %arg4: memref<256x128xf32, #tpu.memory_space<vmem>>) attributes {dimension_semantics = [#tpu.dimension_semantics<parallel>], iteration_bounds = array<i64: 2>, scalar_prefetch = 0 : i64, scratch_operands = 0 : i64, tpu.core_type = #tpu.core_type<tc>, window_params = [{transform_indices = @transform_0, window_bounds = array<i64: 256, 128>}, {pipeline_mode = #tpu.pipeline_mode<synchronous>, transform_indices = @transform_1, window_bounds = array<i64: 1, 128>}, {pipeline_mode = #tpu.pipeline_mode<synchronous>, transform_indices = @transform_2, window_bounds = array<i64: 1, 128>}, {transform_indices = @transform_3, window_bounds = array<i64: 256, 128>}]} {
    %c0 = arith.constant 0 : index
    %c0_0 = arith.constant 0 : index
    %0 = vector.load %arg1[%c0, %c0_0] : memref<256x128xf32, #tpu.memory_space<vmem>>, vector<256x128xf32>
    %c0_1 = arith.constant 0 : index
    %c0_2 = arith.constant 0 : index
    %1 = vector.load %arg2[%c0_1, %c0_2] : memref<1x128xf32, #tpu.memory_space<vmem>>, vector<1x128xf32>
    %2 = vector.broadcast %1 : vector<1x128xf32> to vector<256x128xf32>
    %3 = arith.mulf %0, %2 : vector<256x128xf32>
    %c0_3 = arith.constant 0 : index
    %c0_4 = arith.constant 0 : index
    %4 = vector.load %arg3[%c0_3, %c0_4] : memref<1x128xf32, #tpu.memory_space<vmem>>, vector<1x128xf32>
    %5 = vector.broadcast %4 : vector<1x128xf32> to vector<256x128xf32>
    %6 = arith.addf %3, %5 : vector<256x128xf32>
    %cst = arith.constant 0.000000e+00 : f32
    %7 = vector.broadcast %cst : f32 to vector<256x128xf32>
    %8 = arith.maximumf %6, %7 : vector<256x128xf32>
    %c0_5 = arith.constant 0 : index
    %c0_6 = arith.constant 0 : index
    %9 = vector.load %arg4[%c0_5, %c0_6] : memref<256x128xf32, #tpu.memory_space<vmem>>, vector<256x128xf32>
    tpu.vector_store %arg4[%c0_5, %c0_6], %8 {strides = array<i32>} : memref<256x128xf32, #tpu.memory_space<vmem>>, vector<256x128xf32>,
    return
  }
  func.func @transform_0(%arg0: i32) -> (i32, i32) {
    %c0_i32 = arith.constant 0 : i32
    %c0_i32_0 = arith.constant 0 : i32
    return %arg0, %c0_i32 : i32, i32
  }
  func.func @transform_1(%arg0: i32) -> (i32, i32) {
    %c0_i32 = arith.constant 0 : i32
    %c0_i32_0 = arith.constant 0 : i32
    %c0_i32_1 = arith.constant 0 : i32
    return %c0_i32, %c0_i32_0 : i32, i32
  }
  func.func @transform_2(%arg0: i32) -> (i32, i32) {
    %c0_i32 = arith.constant 0 : i32
    %c0_i32_0 = arith.constant 0 : i32
    %c0_i32_1 = arith.constant 0 : i32
    return %c0_i32, %c0_i32_0 : i32, i32
  }
  func.func @transform_3(%arg0: i32) -> (i32, i32) {
    %c0_i32 = arith.constant 0 : i32
    %c0_i32_0 = arith.constant 0 : i32
    return %arg0, %c0_i32 : i32, i32
  }
}

</mosaic_0001>

<llo_original>
// kernel: aspp_module_forward.3
$region0: #{aspp_module_forward.3}
  #allocation0 [shape = 'u32[]', space=smem, size = 0x4, offset = 0x4, fixed_abs, tag = 'smem constant byte address 0x4 - core index']
  #allocation1 [shape = 'u32[144,128]{1,0:T(1,128)}', space=vmem, size = 0x12000, scoped, tag = 'internal scratch']
  %s0 = inlined_call_operand.vmem [shape: f32[512,128], index: 0, kind: input, shape index: {}]
  %s1 = inlined_call_operand.vmem [shape: f32[1,128], index: 1, kind: input, shape index: {}]
  %s2 = inlined_call_operand.vmem [shape: f32[1,128], index: 2, kind: input, shape index: {}]
  %s3 = inlined_call_operand.vmem [shape: f32[512,128], index: 3, kind: output, shape index: {}]
  %s4 = sld [smem:[#allocation0]]
  $region45: #{aspp_module_forward.3} parent=0
    _
  %s6 = ssub.s32 1, %s4
  %s7 = scalar_select 0, %s6, %s4
  loop: start=0, step=1, limit=4
  $region2: #{aspp_module_forward.3} parent=0 // loop_pre_header
    _
  $region3: #{aspp_module_forward.3} parent=0 // loop_header
    %s9 = sphi 0, %s13
    %p10 = scmp.ge.s32.totalorder %s9, 4
    %s19 = sphi 0, %s21
    %s22 = sphi 0, %s19
    %s23 = sphi 0, %s22
    %s39 = sphi 0, %s23
    %s43 = sphi 0, %s43
    %s45 = sphi 0, %s43
    %s46 = sphi 0, %s45
    %s60 = sphi 0, %s46
    %s64 = sphi 0, %s64
    %s66 = sphi 0, %s64
    %s67 = sphi 0, %s66
    %s81 = sphi 0, %s67
    %s87 = sphi 0, %s89
    %s90 = sphi 0, %s87
    %s91 = sphi 0, %s90
    %s107 = sphi 0, %s91
  $region4: #{aspp_module_forward.3} parent=0 // loop_header_branch
    %12 = sbr.rel (%p10) target = $region8
  $region5: #{aspp_module_forward.3} parent=0 // loop_body
    %s14 = ssub.s32 %s9, 1
    %s15 = ssub.s32 %s9, 2
    %s16 = sadd.s32 %s9, 1
    %s17 = ssub.s32 %s9, %s16
    %p18 = scmp.eq.s32.totalorder %s17, 0
    %s20 = sadd.s32 %s19, 1
    %s21 = scalar_select %p18, %s19, %s20
    %p24 = pneg %p18
    %p25 = scmp.eq.s32.totalorder %s9, 1
    %p26 = por %p24, %p25
    %p27 = scmp.ne.s32.totalorder %s19, %s22
    %p28 = scmp.eq.s32.totalorder %s9, 0
    %p29 = por %p27, %p28
    %p30 = scmp.ne.s32.totalorder %s19, %s22
    %p31 = scmp.eq.s32.totalorder %s14, 1
    %p32 = por %p30, %p31
    %p33 = scmp.ne.s32.totalorder %s22, %s23
    %p34 = scmp.eq.s32.totalorder %s14, 0
    %p35 = por %p33, %p34
    %p36 = scmp.ne.s32.totalorder %s22, %s23
    %p37 = scmp.eq.s32.totalorder %s15, 1
    %p38 = por %p36, %p37
    %p40 = scmp.ne.s32.totalorder %s23, %s39
    %p41 = scmp.eq.s32.totalorder %s15, 0
    %p42 = por %p40, %p41
    %s44 = sadd.s32 %s43, 1
    %p47 = scmp.eq.s32.totalorder %s9, 1
    %p48 = scmp.ne.s32.totalorder %s43, %s45
    %p49 = scmp.eq.s32.totalorder %s9, 0
    %p50 = por %p48, %p49
    %p51 = scmp.ne.s32.totalorder %s43, %s45
    %p52 = scmp.eq.s32.totalorder %s14, 1
    %p53 = por %p51, %p52
    %p54 = scmp.ne.s32.totalorder %s45, %s46
    %p55 = scmp.eq.s32.totalorder %s14, 0
    %p56 = por %p54, %p55
    %p57 = scmp.ne.s32.totalorder %s45, %s46
    %p58 = scmp.eq.s32.totalorder %s15, 1
    %p59 = por %p57, %p58
    %p61 = scmp.ne.s32.totalorder %s46, %s60
    %p62 = scmp.eq.s32.totalorder %s15, 0
    %p63 = por %p61, %p62
    %s65 = sadd.s32 %s64, 1
    %p68 = scmp.eq.s32.totalorder %s9, 1
    %p69 = scmp.ne.s32.totalorder %s64, %s66
    %p70 = scmp.eq.s32.totalorder %s9, 0
    %p71 = por %p69, %p70
    %p72 = scmp.ne.s32.totalorder %s64, %s66
    %p73 = scmp.eq.s32.totalorder %s14, 1
    %p74 = por %p72, %p73
    %p75 = scmp.ne.s32.totalorder %s66, %s67
    %p76 = scmp.eq.s32.totalorder %s14, 0
    %p77 = por %p75, %p76
    %p78 = scmp.ne.s32.totalorder %s66, %s67
    %p79 = scmp.eq.s32.totalorder %s15, 1
    %p80 = por %p78, %p79
    %p82 = scmp.ne.s32.totalorder %s67, %s81
    %p83 = scmp.eq.s32.totalorder %s15, 0
    %p84 = por %p82, %p83
    %s85 = ssub.s32 %s9, %s16
    %p86 = scmp.eq.s32.totalorder %s85, 0
    %s88 = sadd.s32 %s87, 1
    %s89 = scalar_select %p86, %s87, %s88
    %p92 = pneg %p86
    %p93 = scmp.eq.s32.totalorder %s9, 1
    %p94 = por %p92, %p93
    %p95 = scmp.ne.s32.totalorder %s87, %s90
    %p96 = scmp.eq.s32.totalorder %s9, 0
    %p97 = por %p95, %p96
    %p98 = scmp.ne.s32.totalorder %s87, %s90
    %p99 = scmp.eq.s32.totalorder %s14, 1
    %p100 = por %p98, %p99
    %p101 = scmp.ne.s32.totalorder %s90, %s91
    %p102 = scmp.eq.s32.totalorder %s14, 0
    %p103 = por %p101, %p102
    %p104 = scmp.ne.s32.totalorder %s90, %s91
    %p105 = scmp.eq.s32.totalorder %s15, 1
    %p106 = por %p104, %p105
    %p108 = scmp.ne.s32.totalorder %s91, %s107
    %p109 = scmp.eq.s32.totalorder %s15, 0
    %p110 = por %p108, %p109
    %p111 = scmp.le.s32.totalorder 1, %s9
    %p112 = scmp.lt.s32.totalorder %s9, 3
    %p113 = pnand %p111, %p112
    %p114 = pneg %p113
    // Predicated region
    $region9: #{aspp_module_forward.3} parent=5 // pred_check
      _
    $region10: #{aspp_module_forward.3} parent=5 // pred_check_branch
      %116 = sbr.rel (%p113) target = $region12
    $region11: #{aspp_module_forward.3} parent=5 // pred_region
      %s117 = ssub.s32 %s9, 1
      // Predicated region
      $region13: #{aspp_module_forward.3} parent=11 // pred_check
        %p118 = pneg %p56
      $region14: #{aspp_module_forward.3} parent=11 // pred_check_branch
        %120 = sbr.rel (%p118) target = $region16
      $region15: #{aspp_module_forward.3} parent=11 // pred_region
        _
      $region16: #{aspp_module_forward.3} parent=11 // pred_fallthru
        _
      // Predicated region
      $region17: #{aspp_module_forward.3} parent=11 // pred_check
        %p121 = pneg %p77
      $region18: #{aspp_module_forward.3} parent=11 // pred_check_branch
        %123 = sbr.rel (%p121) target = $region20
      $region19: #{aspp_module_forward.3} parent=11 // pred_region
        _
      $region20: #{aspp_module_forward.3} parent=11 // pred_fallthru
        _
    $region12: #{aspp_module_forward.3} parent=5 // pred_fallthru
      _
    %p124 = scmp.lt.s32.totalorder %s9, 2
    // Predicated region
    $region21: #{aspp_module_forward.3} parent=5 // pred_check
      %p125 = pneg %p124
    $region22: #{aspp_module_forward.3} parent=5 // pred_check_branch
      %127 = sbr.rel (%p125) target = $region24
    $region23: #{aspp_module_forward.3} parent=5 // pred_region
      // Predicated region
      $region25: #{aspp_module_forward.3} parent=23 // pred_check
        %p128 = pneg %p29
      $region26: #{aspp_module_forward.3} parent=23 // pred_check_branch
        %130 = sbr.rel (%p128) target = $region28
      $region27: #{aspp_module_forward.3} parent=23 // pred_region
        %s131 = smul.u32 32, %s9
        %p132 = scmp.lt.s32.totalorder %s131, 63
        %s133 = scalar_select %p132, %s131, 63
        %s134 = smul.addr %s133, 8
        %s135 = scalar_lea.vmem %s0, %s134
        %s136 = smul.u32 32, %s9
      $region28: #{aspp_module_forward.3} parent=23 // pred_fallthru
        _
    $region24: #{aspp_module_forward.3} parent=5 // pred_fallthru
      _
    %p137 = scmp.le.s32.totalorder 1, %s9
    %p138 = scmp.lt.s32.totalorder %s9, 3
    %p139 = pnand %p137, %p138
    %p140 = pneg %p139
    // Predicated region
    $region29: #{aspp_module_forward.3} parent=5 // pred_check
      _
    $region30: #{aspp_module_forward.3} parent=5 // pred_check_branch
      %142 = sbr.rel (%p139) target = $region32
    $region31: #{aspp_module_forward.3} parent=5 // pred_region
      %s143 = ssub.s32 %s9, 1
      %s144 = smul.u32 32, %s14
      %p145 = scmp.lt.s32.totalorder %s144, 63
      %s146 = scalar_select %p145, %s144, 63
      %s147 = smul.addr %s146, 8
      %s148 = scalar_lea.vmem %s0, %s147
      %p149 = pneg %p35
      %p150 = pneg %p32
      %p151 = pneg %p56
      %p152 = pneg %p53
      %p153 = pneg %p77
      %p154 = pneg %p74
      %p155 = pneg %p103
      %p156 = pneg %p100
      %s157 = smul.u32 32, %s14
      %p158 = scmp.lt.s32.totalorder %s157, 63
      %s159 = scalar_select %p158, %s157, 63
      %s160 = smul.addr %s159, 8
      %s161 = scalar_lea.vmem %s3, %s160
      %s162 = smul.u32 32, %s14
      %p163 = scmp.lt.s32.totalorder %s162, 63
      %s164 = scalar_select %p163, %s162, 63
      %s165 = smul.addr %s164, 8
      %s166 = scalar_lea.vmem %s0, %s165
      %s167 = smul.u32 32, %s14
      %s168 = smul.u32 32, %s14
      %p169 = scmp.lt.s32.totalorder %s168, 63
      %s170 = scalar_select %p169, %s168, 63
      %s171 = smul.addr %s170, 8
      %s172 = scalar_lea.vmem %s3, %s171
      %s173 = smul.u32 32, %s14
      %v174 = vld [vmem:[%s166] sm:$0xff]
      %v175 = vld [vmem:[%s166 + $0x8] sm:$0xff]
      %v176 = vld [vmem:[%s166 + $0x10] sm:$0xff]
      %v177 = vld [vmem:[%s166 + $0x18] sm:$0xff]
      %v178 = vld [vmem:[%s166 + $0x20] sm:$0xff]
      %v179 = vld [vmem:[%s166 + $0x28] sm:$0xff]
      %v180 = vld [vmem:[%s166 + $0x30] sm:$0xff]
      %v181 = vld [vmem:[%s166 + $0x38] sm:$0xff]
      %v182 = vld [vmem:[%s166 + $0x40] sm:$0xff]
      %v183 = vld [vmem:[%s166 + $0x48] sm:$0xff]
      %v184 = vld [vmem:[%s166 + $0x50] sm:$0xff]
      %v185 = vld [vmem:[%s166 + $0x58] sm:$0xff]
      %v186 = vld [vmem:[%s166 + $0x60] sm:$0xff]
      %v187 = vld [vmem:[%s166 + $0x68] sm:$0xff]
      %v188 = vld [vmem:[%s166 + $0x70] sm:$0xff]
      %v189 = vld [vmem:[%s166 + $0x78] sm:$0xff]
      %v190 = vld [vmem:[%s166 + $0x80] sm:$0xff]
      %v191 = vld [vmem:[%s166 + $0x88] sm:$0xff]
      %v192 = vld [vmem:[%s166 + $0x90] sm:$0xff]
      %v193 = vld [vmem:[%s166 + $0x98] sm:$0xff]
      %v194 = vld [vmem:[%s166 + $0xa0] sm:$0xff]
      %v195 = vld [vmem:[%s166 + $0xa8] sm:$0xff]
      %v196 = vld [vmem:[%s166 + $0xb0] sm:$0xff]
      %v197 = vld [vmem:[%s166 + $0xb8] sm:$0xff]
      %v198 = vld [vmem:[%s166 + $0xc0] sm:$0xff]
      %v199 = vld [vmem:[%s166 + $0xc8] sm:$0xff]
      %v200 = vld [vmem:[%s166 + $0xd0] sm:$0xff]
      %v201 = vld [vmem:[%s166 + $0xd8] sm:$0xff]
      %v202 = vld [vmem:[%s166 + $0xe0] sm:$0xff]
      %v203 = vld [vmem:[%s166 + $0xe8] sm:$0xff]
      %v204 = vld [vmem:[%s166 + $0xf0] sm:$0xff]
      %v205 = vld [vmem:[%s166 + $0xf8] sm:$0xff]
      %v206 = vld [vmem:[%s1] sm:$0x1]
      %v208 = vlaneseq
      %v209 = vshrl.u32 %v208, 7
      %v210 = vsub.s32 0, %v209
      %v211 = vrot.slane %v206, %v210
      %v213 = vmul.f32 %v174, %v211
      %v214 = vmul.f32 %v175, %v211
      %v215 = vmul.f32 %v176, %v211
      %v216 = vmul.f32 %v177, %v211
      %v217 = vmul.f32 %v178, %v211
      %v218 = vmul.f32 %v179, %v211
      %v219 = vmul.f32 %v180, %v211
      %v220 = vmul.f32 %v181, %v211
      %v221 = vmul.f32 %v182, %v211
      %v222 = vmul.f32 %v183, %v211
      %v223 = vmul.f32 %v184, %v211
      %v224 = vmul.f32 %v185, %v211
      %v225 = vmul.f32 %v186, %v211
      %v226 = vmul.f32 %v187, %v211
      %v227 = vmul.f32 %v188, %v211
      %v228 = vmul.f32 %v189, %v211
      %v229 = vmul.f32 %v190, %v211
      %v230 = vmul.f32 %v191, %v211
      %v231 = vmul.f32 %v192, %v211
      %v232 = vmul.f32 %v193, %v211
      %v233 = vmul.f32 %v194, %v211
      %v234 = vmul.f32 %v195, %v211
      %v235 = vmul.f32 %v196, %v211
      %v236 = vmul.f32 %v197, %v211
      %v237 = vmul.f32 %v198, %v211
      %v238 = vmul.f32 %v199, %v211
      %v239 = vmul.f32 %v200, %v211
      %v240 = vmul.f32 %v201, %v211
      %v241 = vmul.f32 %v202, %v211
      %v242 = vmul.f32 %v203, %v211
      %v243 = vmul.f32 %v204, %v211
      %v244 = vmul.f32 %v205, %v211
      %v245 = vld [vmem:[%s2] sm:$0x1]
      %v247 = vlaneseq
      %v248 = vshrl.u32 %v247, 7
      %v249 = vsub.s32 0, %v248
      %v250 = vrot.slane %v245, %v249
      %v252 = vadd.f32 %v213, %v250
      %v253 = vadd.f32 %v214, %v250
      %v254 = vadd.f32 %v215, %v250
      %v255 = vadd.f32 %v216, %v250
      %v256 = vadd.f32 %v217, %v250
      %v257 = vadd.f32 %v218, %v250
      %v258 = vadd.f32 %v219, %v250
      %v259 = vadd.f32 %v220, %v250
      %v260 = vadd.f32 %v221, %v250
      %v261 = vadd.f32 %v222, %v250
      %v262 = vadd.f32 %v223, %v250
      %v263 = vadd.f32 %v224, %v250
      %v264 = vadd.f32 %v225, %v250
      %v265 = vadd.f32 %v226, %v250
      %v266 = vadd.f32 %v227, %v250
      %v267 = vadd.f32 %v228, %v250
      %v268 = vadd.f32 %v229, %v250
      %v269 = vadd.f32 %v230, %v250
      %v270 = vadd.f32 %v231, %v250
      %v271 = vadd.f32 %v232, %v250
      %v272 = vadd.f32 %v233, %v250
      %v273 = vadd.f32 %v234, %v250
      %v274 = vadd.f32 %v235, %v250
      %v275 = vadd.f32 %v236, %v250
      %v276 = vadd.f32 %v237, %v250
      %v277 = vadd.f32 %v238, %v250
      %v278 = vadd.f32 %v239, %v250
      %v279 = vadd.f32 %v240, %v250
      %v280 = vadd.f32 %v241, %v250
      %v281 = vadd.f32 %v242, %v250
      %v282 = vadd.f32 %v243, %v250
      %v283 = vadd.f32 %v244, %v250
      %v284 = vmax.f32 %v252, 0.0
      %v285 = vmax.f32 %v253, 0.0
      %v286 = vmax.f32 %v254, 0.0
      %v287 = vmax.f32 %v255, 0.0
      %v288 = vmax.f32 %v256, 0.0
      %v289 = vmax.f32 %v257, 0.0
      %v290 = vmax.f32 %v258, 0.0
      %v291 = vmax.f32 %v259, 0.0
      %v292 = vmax.f32 %v260, 0.0
      %v293 = vmax.f32 %v261, 0.0
      %v294 = vmax.f32 %v262, 0.0
      %v295 = vmax.f32 %v263, 0.0
      %v296 = vmax.f32 %v264, 0.0
      %v297 = vmax.f32 %v265, 0.0
      %v298 = vmax.f32 %v266, 0.0
      %v299 = vmax.f32 %v267, 0.0
      %v300 = vmax.f32 %v268, 0.0
      %v301 = vmax.f32 %v269, 0.0
      %v302 = vmax.f32 %v270, 0.0
      %v303 = vmax.f32 %v271, 0.0
      %v304 = vmax.f32 %v272, 0.0
      %v305 = vmax.f32 %v273, 0.0
      %v306 = vmax.f32 %v274, 0.0
      %v307 = vmax.f32 %v275, 0.0
      %v308 = vmax.f32 %v276, 0.0
      %v309 = vmax.f32 %v277, 0.0
      %v310 = vmax.f32 %v278, 0.0
      %v311 = vmax.f32 %v279, 0.0
      %v312 = vmax.f32 %v280, 0.0
      %v313 = vmax.f32 %v281, 0.0
      %v314 = vmax.f32 %v282, 0.0
      %v315 = vmax.f32 %v283, 0.0
      %316 = vst [vmem:[%s172] sm:$0xff] %v284
      %317 = vst [vmem:[%s172 + $0x8] sm:$0xff] %v285
      %318 = vst [vmem:[%s172 + $0x10] sm:$0xff] %v286
      %319 = vst [vmem:[%s172 + $0x18] sm:$0xff] %v287
      %320 = vst [vmem:[%s172 + $0x20] sm:$0xff] %v288
      %321 = vst [vmem:[%s172 + $0x28] sm:$0xff] %v289
      %322 = vst [vmem:[%s172 + $0x30] sm:$0xff] %v290
      %323 = vst [vmem:[%s172 + $0x38] sm:$0xff] %v291
      %324 = vst [vmem:[%s172 + $0x40] sm:$0xff] %v292
      %325 = vst [vmem:[%s172 + $0x48] sm:$0xff] %v293
      %326 = vst [vmem:[%s172 + $0x50] sm:$0xff] %v294
      %327 = vst [vmem:[%s172 + $0x58] sm:$0xff] %v295
      %328 = vst [vmem:[%s172 + $0x60] sm:$0xff] %v296
      %329 = vst [vmem:[%s172 + $0x68] sm:$0xff] %v297
      %330 = vst [vmem:[%s172 + $0x70] sm:$0xff] %v298
      %331 = vst [vmem:[%s172 + $0x78] sm:$0xff] %v299
      %332 = vst [vmem:[%s172 + $0x80] sm:$0xff] %v300
      %333 = vst [vmem:[%s172 + $0x88] sm:$0xff] %v301
      %334 = vst [vmem:[%s172 + $0x90] sm:$0xff] %v302
      %335 = vst [vmem:[%s172 + $0x98] sm:$0xff] %v303
      %336 = vst [vmem:[%s172 + $0xa0] sm:$0xff] %v304
      %337 = vst [vmem:[%s172 + $0xa8] sm:$0xff] %v305
      %338 = vst [vmem:[%s172 + $0xb0] sm:$0xff] %v306
      %339 = vst [vmem:[%s172 + $0xb8] sm:$0xff] %v307
      %340 = vst [vmem:[%s172 + $0xc0] sm:$0xff] %v308
      %341 = vst [vmem:[%s172 + $0xc8] sm:$0xff] %v309
      %342 = vst [vmem:[%s172 + $0xd0] sm:$0xff] %v310
      %343 = vst [vmem:[%s172 + $0xd8] sm:$0xff] %v311
      %344 = vst [vmem:[%s172 + $0xe0] sm:$0xff] %v312
      %345 = vst [vmem:[%s172 + $0xe8] sm:$0xff] %v313
      %346 = vst [vmem:[%s172 + $0xf0] sm:$0xff] %v314
      %347 = vst [vmem:[%s172 + $0xf8] sm:$0xff] %v315
      %s348 = smul.u32 32, %s14
      %p349 = scmp.lt.s32.totalorder %s348, 63
      %s350 = scalar_select %p349, %s348, 63
      %s351 = smul.addr %s350, 8
      %s352 = scalar_lea.vmem %s3, %s351
      // Predicated region
      $region33: #{aspp_module_forward.3} parent=31 // pred_check
        %p353 = pneg %p100
      $region34: #{aspp_module_forward.3} parent=31 // pred_check_branch
        %355 = sbr.rel (%p353) target = $region36
      $region35: #{aspp_module_forward.3} parent=31 // pred_region
        %s356 = smul.u32 32, %s14
      $region36: #{aspp_module_forward.3} parent=31 // pred_fallthru
        _
    $region32: #{aspp_module_forward.3} parent=5 // pred_fallthru
      _
    %p357 = scmp.le.s32.totalorder 2, %s9
    // Predicated region
    $region37: #{aspp_module_forward.3} parent=5 // pred_check
      %p358 = pneg %p357
    $region38: #{aspp_module_forward.3} parent=5 // pred_check_branch
      %360 = sbr.rel (%p358) target = $region40
    $region39: #{aspp_module_forward.3} parent=5 // pred_region
      %s361 = ssub.s32 %s9, 2
      // Predicated region
      $region41: #{aspp_module_forward.3} parent=39 // pred_check
        %p362 = pneg %p106
      $region42: #{aspp_module_forward.3} parent=39 // pred_check_branch
        %364 = sbr.rel (%p362) target = $region44
      $region43: #{aspp_module_forward.3} parent=39 // pred_region
        %s365 = smul.u32 32, %s15
        %p366 = scmp.lt.s32.totalorder %s365, 63
        %s367 = scalar_select %p366, %s365, 63
        %s368 = smul.addr %s367, 8
        %s369 = scalar_lea.vmem %s3, %s368
      $region44: #{aspp_module_forward.3} parent=39 // pred_fallthru
        _
    $region40: #{aspp_module_forward.3} parent=5 // pred_fallthru
      _
  $region6: #{aspp_module_forward.3} parent=0 // loop_footer
    %s13 = sadd.s32 1, %s9
  $region7: #{aspp_module_forward.3} parent=0 // loop_footer_branch
    %8 = sbr.rel target = $region3
  $region8: #{aspp_module_forward.3} parent=0 // loop_exit
    _

// kernel: aspp_module_forward.2
$region0: #{aspp_module_forward.2}
  #allocation0 [shape = 'u32[]', space=smem, size = 0x4, offset = 0x4, fixed_abs, tag = 'smem constant byte address 0x4 - core index']
  #allocation1 [shape = 'u32[144,128]{1,0:T(1,128)}', space=vmem, size = 0x12000, scoped, tag = 'internal scratch']
  %s0 = inlined_call_operand.vmem [shape: f32[512,36], index: 0, kind: input, shape index: {}]
  %s1 = inlined_call_operand.vmem [shape: f32[36,128], index: 1, kind: input, shape index: {}]
  %s2 = inlined_call_operand.vmem [shape: f32[512,128], index: 2, kind: output, shape index: {0}]
  %s3 = inlined_call_operand.vmem [shape: f32[16,128], index: 3, kind: output, shape index: {1}]
  %4 = xla_tuple %s2, %s3
  %s5 = sld [smem:[#allocation0]]
  $region49: #{aspp_module_forward.2} parent=0
    _
  %s7 = ssub.s32 1, %s5
  %s8 = scalar_select 0, %s7, %s5
  loop: start=0, step=1, limit=4
  $region2: #{aspp_module_forward.2} parent=0 // loop_pre_header
    _
  $region3: #{aspp_module_forward.2} parent=0 // loop_header
    %s10 = sphi 0, %s14
    %p11 = scmp.ge.s32.totalorder %s10, 4
    %s20 = sphi 0, %s22
    %s23 = sphi 0, %s20
    %s24 = sphi 0, %s23
    %s40 = sphi 0, %s24
    %s44 = sphi 0, %s44
    %s46 = sphi 0, %s44
    %s47 = sphi 0, %s46
    %s61 = sphi 0, %s47
    %s67 = sphi 0, %s69
    %s70 = sphi 0, %s67
    %s71 = sphi 0, %s70
    %s87 = sphi 0, %s71
    %s93 = sphi 0, %s95
    %s96 = sphi 0, %s93
    %s97 = sphi 0, %s96
    %s113 = sphi 0, %s97
  $region4: #{aspp_module_forward.2} parent=0 // loop_header_branch
    %13 = sbr.rel (%p11) target = $region8
  $region5: #{aspp_module_forward.2} parent=0 // loop_body
    %s15 = ssub.s32 %s10, 1
    %s16 = ssub.s32 %s10, 2
    %s17 = sadd.s32 %s10, 1
    %s18 = ssub.s32 %s10, %s17
    %p19 = scmp.eq.s32.totalorder %s18, 0
    %s21 = sadd.s32 %s20, 1
    %s22 = scalar_select %p19, %s20, %s21
    %p25 = pneg %p19
    %p26 = scmp.eq.s32.totalorder %s10, 1
    %p27 = por %p25, %p26
    %p28 = scmp.ne.s32.totalorder %s20, %s23
    %p29 = scmp.eq.s32.totalorder %s10, 0
    %p30 = por %p28, %p29
    %p31 = scmp.ne.s32.totalorder %s20, %s23
    %p32 = scmp.eq.s32.totalorder %s15, 1
    %p33 = por %p31, %p32
    %p34 = scmp.ne.s32.totalorder %s23, %s24
    %p35 = scmp.eq.s32.totalorder %s15, 0
    %p36 = por %p34, %p35
    %p37 = scmp.ne.s32.totalorder %s23, %s24
    %p38 = scmp.eq.s32.totalorder %s16, 1
    %p39 = por %p37, %p38
    %p41 = scmp.ne.s32.totalorder %s24, %s40
    %p42 = scmp.eq.s32.totalorder %s16, 0
    %p43 = por %p41, %p42
    %s45 = sadd.s32 %s44, 1
    %p48 = scmp.eq.s32.totalorder %s10, 1
    %p49 = scmp.ne.s32.totalorder %s44, %s46
    %p50 = scmp.eq.s32.totalorder %s10, 0
    %p51 = por %p49, %p50
    %p52 = scmp.ne.s32.totalorder %s44, %s46
    %p53 = scmp.eq.s32.totalorder %s15, 1
    %p54 = por %p52, %p53
    %p55 = scmp.ne.s32.totalorder %s46, %s47
    %p56 = scmp.eq.s32.totalorder %s15, 0
    %p57 = por %p55, %p56
    %p58 = scmp.ne.s32.totalorder %s46, %s47
    %p59 = scmp.eq.s32.totalorder %s16, 1
    %p60 = por %p58, %p59
    %p62 = scmp.ne.s32.totalorder %s47, %s61
    %p63 = scmp.eq.s32.totalorder %s16, 0
    %p64 = por %p62, %p63
    %s65 = ssub.s32 %s10, %s17
    %p66 = scmp.eq.s32.totalorder %s65, 0
    %s68 = sadd.s32 %s67, 1
    %s69 = scalar_select %p66, %s67, %s68
    %p72 = pneg %p66
    %p73 = scmp.eq.s32.totalorder %s10, 1
    %p74 = por %p72, %p73
    %p75 = scmp.ne.s32.totalorder %s67, %s70
    %p76 = scmp.eq.s32.totalorder %s10, 0
    %p77 = por %p75, %p76
    %p78 = scmp.ne.s32.totalorder %s67, %s70
    %p79 = scmp.eq.s32.totalorder %s15, 1
    %p80 = por %p78, %p79
    %p81 = scmp.ne.s32.totalorder %s70, %s71
    %p82 = scmp.eq.s32.totalorder %s15, 0
    %p83 = por %p81, %p82
    %p84 = scmp.ne.s32.totalorder %s70, %s71
    %p85 = scmp.eq.s32.totalorder %s16, 1
    %p86 = por %p84, %p85
    %p88 = scmp.ne.s32.totalorder %s71, %s87
    %p89 = scmp.eq.s32.totalorder %s16, 0
    %p90 = por %p88, %p89
    %s91 = ssub.s32 %s10, %s17
    %p92 = scmp.eq.s32.totalorder %s91, 0
    %s94 = sadd.s32 %s93, 1
    %s95 = scalar_select %p92, %s93, %s94
    %p98 = pneg %p92
    %p99 = scmp.eq.s32.totalorder %s10, 1
    %p100 = por %p98, %p99
    %p101 = scmp.ne.s32.totalorder %s93, %s96
    %p102 = scmp.eq.s32.totalorder %s10, 0
    %p103 = por %p101, %p102
    %p104 = scmp.ne.s32.totalorder %s93, %s96
    %p105 = scmp.eq.s32.totalorder %s15, 1
    %p106 = por %p104, %p105
    %p107 = scmp.ne.s32.totalorder %s96, %s97
    %p108 = scmp.eq.s32.totalorder %s15, 0
    %p109 = por %p107, %p108
    %p110 = scmp.ne.s32.totalorder %s96, %s97
    %p111 = scmp.eq.s32.totalorder %s16, 1
    %p112 = por %p110, %p111
    %p114 = scmp.ne.s32.totalorder %s97, %s113
    %p115 = scmp.eq.s32.totalorder %s16, 0
    %p116 = por %p114, %p115
    %p117 = scmp.le.s32.totalorder 1, %s10
    %p118 = scmp.lt.s32.totalorder %s10, 3
    %p119 = pnand %p117, %p118
    %p120 = pneg %p119
    // Predicated region
    $region9: #{aspp_module_forward.2} parent=5 // pred_check
      _
    $region10: #{aspp_module_forward.2} parent=5 // pred_check_branch
      %122 = sbr.rel (%p119) target = $region12
    $region11: #{aspp_module_forward.2} parent=5 // pred_region
      %s123 = ssub.s32 %s10, 1
      // Predicated region
      $region13: #{aspp_module_forward.2} parent=11 // pred_check
        %p124 = pneg %p57
      $region14: #{aspp_module_forward.2} parent=11 // pred_check_branch
        %126 = sbr.rel (%p124) target = $region16
      $region15: #{aspp_module_forward.2} parent=11 // pred_region
        _
      $region16: #{aspp_module_forward.2} parent=11 // pred_fallthru
        _
    $region12: #{aspp_module_forward.2} parent=5 // pred_fallthru
      _
    %p127 = scmp.lt.s32.totalorder %s10, 2
    // Predicated region
    $region17: #{aspp_module_forward.2} parent=5 // pred_check
      %p128 = pneg %p127
    $region18: #{aspp_module_forward.2} parent=5 // pred_check_branch
      %130 = sbr.rel (%p128) target = $region20
    $region19: #{aspp_module_forward.2} parent=5 // pred_region
      // Predicated region
      $region21: #{aspp_module_forward.2} parent=19 // pred_check
        %p131 = pneg %p30
      $region22: #{aspp_module_forward.2} parent=19 // pred_check_branch
        %133 = sbr.rel (%p131) target = $region24
      $region23: #{aspp_module_forward.2} parent=19 // pred_region
        %s134 = smul.u32 32, %s10
        %p135 = scmp.lt.s32.totalorder %s134, 63
        %s136 = scalar_select %p135, %s134, 63
        %s137 = smul.addr %s136, 8
        %s138 = scalar_lea.vmem %s0, %s137
        %s139 = smul.u32 32, %s10
      $region24: #{aspp_module_forward.2} parent=19 // pred_fallthru
        _
    $region20: #{aspp_module_forward.2} parent=5 // pred_fallthru
      _
    %p140 = scmp.le.s32.totalorder 1, %s10
    %p141 = scmp.lt.s32.totalorder %s10, 3
    %p142 = pnand %p140, %p141
    %p143 = pneg %p142
    // Predicated region
    $region25: #{aspp_module_forward.2} parent=5 // pred_check
      _
    $region26: #{aspp_module_forward.2} parent=5 // pred_check_branch
      %145 = sbr.rel (%p142) target = $region28
    $region27: #{aspp_module_forward.2} parent=5 // pred_region
      %s146 = ssub.s32 %s10, 1
      %s147 = smul.u32 32, %s15
      %p148 = scmp.lt.s32.totalorder %s147, 63
      %s149 = scalar_select %p148, %s147, 63
      %s150 = smul.addr %s149, 8
      %s151 = scalar_lea.vmem %s0, %s150
      %p152 = pneg %p36
      %p153 = pneg %p33
      %p154 = pneg %p57
      %p155 = pneg %p54
      %p156 = pneg %p83
      %p157 = pneg %p80
      %s158 = smul.u32 32, %s15
      %p159 = scmp.lt.s32.totalorder %s158, 63
      %s160 = scalar_select %p159, %s158, 63
      %s161 = smul.addr %s160, 8
      %s162 = scalar_lea.vmem %s2, %s161
      %p163 = pneg %p109
      %p164 = pneg %p106
      %p165 = scmp.lt.s32.totalorder %s15, 1
      %s166 = scalar_select %p165, %s15, 1
      %s167 = smul.addr %s166, 8
      %s168 = scalar_lea.vmem %s3, %s167
      %s169 = smul.u32 32, %s15
      %p170 = scmp.lt.s32.totalorder %s169, 63
      %s171 = scalar_select %p170, %s169, 63
      %s172 = smul.addr %s171, 8
      %s173 = scalar_lea.vmem %s0, %s172
      %s174 = smul.u32 32, %s15
      %s175 = smul.u32 32, %s15
      %p176 = scmp.lt.s32.totalorder %s175, 63
      %s177 = scalar_select %p176, %s175, 63
      %s178 = smul.addr %s177, 8
      %s179 = scalar_lea.vmem %s2, %s178
      %s180 = smul.u32 32, %s15
      %p181 = scmp.lt.s32.totalorder %s15, 1
      %s182 = scalar_select %p181, %s15, 1
      %s183 = smul.addr %s182, 8
      %s184 = scalar_lea.vmem %s3, %s183
      %v185 = vld [vmem:[%s173] sm:$0xff]
      %v186 = vld [vmem:[%s173 + $0x8] sm:$0xff]
      %v187 = vld [vmem:[%s173 + $0x10] sm:$0xff]
      %v188 = vld [vmem:[%s173 + $0x18] sm:$0xff]
      %v189 = vld [vmem:[%s173 + $0x20] sm:$0xff]
      %v190 = vld [vmem:[%s173 + $0x28] sm:$0xff]
      %v191 = vld [vmem:[%s173 + $0x30] sm:$0xff]
      %v192 = vld [vmem:[%s173 + $0x38] sm:$0xff]
      %v193 = vld [vmem:[%s173 + $0x40] sm:$0xff]
      %v194 = vld [vmem:[%s173 + $0x48] sm:$0xff]
      %v195 = vld [vmem:[%s173 + $0x50] sm:$0xff]
      %v196 = vld [vmem:[%s173 + $0x58] sm:$0xff]
      %v197 = vld [vmem:[%s173 + $0x60] sm:$0xff]
      %v198 = vld [vmem:[%s173 + $0x68] sm:$0xff]
      %v199 = vld [vmem:[%s173 + $0x70] sm:$0xff]
      %v200 = vld [vmem:[%s173 + $0x78] sm:$0xff]
      %v201 = vld [vmem:[%s173 + $0x80] sm:$0xff]
      %v202 = vld [vmem:[%s173 + $0x88] sm:$0xff]
      %v203 = vld [vmem:[%s173 + $0x90] sm:$0xff]
      %v204 = vld [vmem:[%s173 + $0x98] sm:$0xff]
      %v205 = vld [vmem:[%s173 + $0xa0] sm:$0xff]
      %v206 = vld [vmem:[%s173 + $0xa8] sm:$0xff]
      %v207 = vld [vmem:[%s173 + $0xb0] sm:$0xff]
      %v208 = vld [vmem:[%s173 + $0xb8] sm:$0xff]
      %v209 = vld [vmem:[%s173 + $0xc0] sm:$0xff]
      %v210 = vld [vmem:[%s173 + $0xc8] sm:$0xff]
      %v211 = vld [vmem:[%s173 + $0xd0] sm:$0xff]
      %v212 = vld [vmem:[%s173 + $0xd8] sm:$0xff]
      %v213 = vld [vmem:[%s173 + $0xe0] sm:$0xff]
      %v214 = vld [vmem:[%s173 + $0xe8] sm:$0xff]
      %v215 = vld [vmem:[%s173 + $0xf0] sm:$0xff]
      %v216 = vld [vmem:[%s173 + $0xf8] sm:$0xff]
      %v217 = vld [vmem:[%s1] sm:$0xff]
      %v218 = vld [vmem:[%s1 + $0x8] sm:$0xff]
      %v219 = vld [vmem:[%s1 + $0x10] sm:$0xff]
      %v220 = vld [vmem:[%s1 + $0x18] sm:$0xff]
      %v221 = vld [vmem:[%s1 + $0x20] sm:$0xf]
      %vm222 = vcmask 293888
      %v224 = vsel %vm222, %v185, 0
      %v227 = vsel %vm222, %v186, 0
      %v230 = vsel %vm222, %v187, 0
      %v233 = vsel %vm222, %v188, 0
      %v236 = vsel %vm222, %v189, 0
      %v239 = vsel %vm222, %v190, 0
      %v242 = vsel %vm222, %v191, 0
      %v245 = vsel %vm222, %v192, 0
      %v248 = vsel %vm222, %v193, 0
      %v251 = vsel %vm222, %v194, 0
      %v254 = vsel %vm222, %v195, 0
      %v257 = vsel %vm222, %v196, 0
      %v260 = vsel %vm222, %v197, 0
      %v263 = vsel %vm222, %v198, 0
      %v266 = vsel %vm222, %v199, 0
      %v269 = vsel %vm222, %v200, 0
      %v272 = vsel %vm222, %v201, 0
      %v275 = vsel %vm222, %v202, 0
      %v278 = vsel %vm222, %v203, 0
      %v281 = vsel %vm222, %v204, 0
      %v284 = vsel %vm222, %v205, 0
      %v287 = vsel %vm222, %v206, 0
      %v290 = vsel %vm222, %v207, 0
      %v293 = vsel %vm222, %v208, 0
      %v296 = vsel %vm222, %v209, 0
      %v299 = vsel %vm222, %v210, 0
      %v302 = vsel %vm222, %v211, 0
      %v305 = vsel %vm222, %v212, 0
      %v308 = vsel %vm222, %v213, 0
      %v311 = vsel %vm222, %v214, 0
      %v314 = vsel %vm222, %v215, 0
      %v317 = vsel %vm222, %v216, 0
      %vm319 = vcmask 1043456
      %v321 = vsel %vm319, %v221, 0
      %323 = vmatprep.subr.mxu0 0.0
      %324 = vmatpush1.msra.mxu0 0.0
      %325 = vmatprep.subr.mxu0 0.0
      %326 = vmatpush1.msra.mxu0 0.0
      %327 = vmatprep.subr.mxu0 0.0
      %328 = vmatpush1.msra.mxu0 0.0
      %329 = vmatprep.subr.mxu0 0.0
      %330 = vmatpush1.msra.mxu0 0.0
      %331 = vmatprep.subr.mxu0 0.0
      %332 = vmatpush1.msra.mxu0 0.0
      %333 = vmatprep.subr.mxu0 0.0
      %334 = vmatpush1.msra.mxu0 0.0
      %335 = vmatprep.subr.mxu0 0.0
      %336 = vmatpush1.msra.mxu0 0.0
      %337 = vmatprep.subr.mxu0 0.0
      %338 = vmatpush1.msra.mxu0 0.0
      %339 = vmatprep.subr.mxu0 0.0
      %340 = vmatpush1.msra.mxu0 0.0
      %341 = vmatprep.subr.mxu0 0.0
      %342 = vmatpush1.msra.mxu0 0.0
      %343 = vmatprep.subr.mxu0 0.0
      %344 = vmatpush1.msra.mxu0 0.0
      %345 = vmatprep.subr.mxu0 0.0
      %346 = vmatpush1.msra.mxu0 %v321
      %347 = vmatprep.subr.mxu0 0.0
      %348 = vmatpush1.msra.mxu0 %v220
      %349 = vmatprep.subr.mxu0 0.0
      %350 = vmatpush1.msra.mxu0 %v219
      %351 = vmatprep.subr.mxu0 0.0
      %352 = vmatpush1.msra.mxu0 %v218
      %353 = vmatprep.subr.mxu0 0.0
      %354 = vmatpush1.msra.mxu0 %v217
      %355 = vmatprep.subr.mxu0 0.0
      %356 = vmatpush2.msra.mxu0 0.0
      %357 = vmatprep.subr.mxu0 0.0
      %358 = vmatpush2.msra.mxu0 0.0
      %359 = vmatprep.subr.mxu0 0.0
      %360 = vmatpush2.msra.mxu0 0.0
      %361 = vmatprep.subr.mxu0 0.0
      %362 = vmatpush2.msra.mxu0 0.0
      %363 = vmatprep.subr.mxu0 0.0
      %364 = vmatpush2.msra.mxu0 0.0
      %365 = vmatprep.subr.mxu0 0.0
      %366 = vmatpush2.msra.mxu0 0.0
      %367 = vmatprep.subr.mxu0 0.0
      %368 = vmatpush2.msra.mxu0 0.0
      %369 = vmatprep.subr.mxu0 0.0
      %370 = vmatpush2.msra.mxu0 0.0
      %371 = vmatprep.subr.mxu0 0.0
      %372 = vmatpush2.msra.mxu0 0.0
      %373 = vmatprep.subr.mxu0 0.0
      %374 = vmatpush2.msra.mxu0 0.0
      %375 = vmatprep.subr.mxu0 0.0
      %376 = vmatpush2.msra.mxu0 0.0
      %377 = vmatprep.subr.mxu0 0.0
      %378 = vmatpush2.msra.mxu0 0.0
      %379 = vmatprep.subr.mxu0 0.0
      %380 = vmatpush2.msra.mxu0 0.0
      %381 = vmatprep.subr.mxu0 0.0
      %382 = vmatpush2.msra.mxu0 0.0
      %383 = vmatprep.subr.mxu0 0.0
      %384 = vmatpush2.msra.mxu0 0.0
      %385 = vmatprep.subr.mxu0 0.0
      %386 = vmatpush2.msra.mxu0 0.0
      %387 = vmatprep.mubr.f32.mxu0 0.0
      %388 = vmatmul.mubr.f32.gmra.mxu0 %v224
      %v389 = vpop.f32.mrf.mxu0
      %v390 = vadd.f32 0.0, %v389
      %v391 = vpop.f32.mrf.mxu0
      %392 = vmatprep.mubr.f32.mxu0 0.0
      %393 = vmatmul.mubr.f32.gmra.mxu0 %v227
      %v394 = vpop.f32.mrf.mxu0
      %v395 = vadd.f32 0.0, %v394
      %v396 = vpop.f32.mrf.mxu0
      %397 = vmatprep.mubr.f32.mxu0 0.0
      %398 = vmatmul.mubr.f32.gmra.mxu0 %v230
      %v399 = vpop.f32.mrf.mxu0
      %v400 = vadd.f32 0.0, %v399
      %v401 = vpop.f32.mrf.mxu0
      %402 = vmatprep.mubr.f32.mxu0 0.0
      %403 = vmatmul.mubr.f32.gmra.mxu0 %v233
      %v404 = vpop.f32.mrf.mxu0
      %v405 = vadd.f32 0.0, %v404
      %v406 = vpop.f32.mrf.mxu0
      %407 = vmatprep.mubr.f32.mxu0 0.0
      %408 = vmatmul.mubr.f32.gmra.mxu0 %v236
      %v409 = vpop.f32.mrf.mxu0
      %v410 = vadd.f32 0.0, %v409
      %v411 = vpop.f32.mrf.mxu0
      %412 = vmatprep.mubr.f32.mxu0 0.0
      %413 = vmatmul.mubr.f32.gmra.mxu0 %v239
      %v414 = vpop.f32.mrf.mxu0
      %v415 = vadd.f32 0.0, %v414
      %v416 = vpop.f32.mrf.mxu0
      %417 = vmatprep.mubr.f32.mxu0 0.0
      %418 = vmatmul.mubr.f32.gmra.mxu0 %v242
      %v419 = vpop.f32.mrf.mxu0
      %v420 = vadd.f32 0.0, %v419
      %v421 = vpop.f32.mrf.mxu0
      %422 = vmatprep.mubr.f32.mxu0 0.0
      %423 = vmatmul.mubr.f32.gmra.mxu0 %v245
      %v424 = vpop.f32.mrf.mxu0
      %v425 = vadd.f32 0.0, %v424
      %v426 = vpop.f32.mrf.mxu0
      %427 = vmatprep.mubr.f32.mxu0 0.0
      %428 = vmatmul.mubr.f32.gmra.mxu0 %v248
      %v429 = vpop.f32.mrf.mxu0
      %v430 = vadd.f32 0.0, %v429
      %v431 = vpop.f32.mrf.mxu0
      %432 = vmatprep.mubr.f32.mxu0 0.0
      %433 = vmatmul.mubr.f32.gmra.mxu0 %v251
      %v434 = vpop.f32.mrf.mxu0
      %v435 = vadd.f32 0.0, %v434
      %v436 = vpop.f32.mrf.mxu0
      %437 = vmatprep.mubr.f32.mxu0 0.0
      %438 = vmatmul.mubr.f32.gmra.mxu0 %v254
      %v439 = vpop.f32.mrf.mxu0
      %v440 = vadd.f32 0.0, %v439
      %v441 = vpop.f32.mrf.mxu0
      %442 = vmatprep.mubr.f32.mxu0 0.0
      %443 = vmatmul.mubr.f32.gmra.mxu0 %v257
      %v444 = vpop.f32.mrf.mxu0
      %v445 = vadd.f32 0.0, %v444
      %v446 = vpop.f32.mrf.mxu0
      %447 = vmatprep.mubr.f32.mxu0 0.0
      %448 = vmatmul.mubr.f32.gmra.mxu0 %v260
      %v449 = vpop.f32.mrf.mxu0
      %v450 = vadd.f32 0.0, %v449
      %v451 = vpop.f32.mrf.mxu0
      %452 = vmatprep.mubr.f32.mxu0 0.0
      %453 = vmatmul.mubr.f32.gmra.mxu0 %v263
      %v454 = vpop.f32.mrf.mxu0
      %v455 = vadd.f32 0.0, %v454
      %v456 = vpop.f32.mrf.mxu0
      %457 = vmatprep.mubr.f32.mxu0 0.0
      %458 = vmatmul.mubr.f32.gmra.mxu0 %v266
      %v459 = vpop.f32.mrf.mxu0
      %v460 = vadd.f32 0.0, %v459
      %v461 = vpop.f32.mrf.mxu0
      %462 = vmatprep.mubr.f32.mxu0 0.0
      %463 = vmatmul.mubr.f32.gmra.mxu0 %v269
      %v464 = vpop.f32.mrf.mxu0
      %v465 = vadd.f32 0.0, %v464
      %v466 = vpop.f32.mrf.mxu0
      %467 = vmatprep.mubr.f32.mxu0 0.0
      %468 = vmatmul.mubr.f32.gmra.mxu0 %v272
      %v469 = vpop.f32.mrf.mxu0
      %v470 = vadd.f32 0.0, %v469
      %v471 = vpop.f32.mrf.mxu0
      %472 = vmatprep.mubr.f32.mxu0 0.0
      %473 = vmatmul.mubr.f32.gmra.mxu0 %v275
      %v474 = vpop.f32.mrf.mxu0
      %v475 = vadd.f32 0.0, %v474
      %v476 = vpop.f32.mrf.mxu0
      %477 = vmatprep.mubr.f32.mxu0 0.0
      %478 = vmatmul.mubr.f32.gmra.mxu0 %v278
      %v479 = vpop.f32.mrf.mxu0
      %v480 = vadd.f32 0.0, %v479
      %v481 = vpop.f32.mrf.mxu0
      %482 = vmatprep.mubr.f32.mxu0 0.0
      %483 = vmatmul.mubr.f32.gmra.mxu0 %v281
      %v484 = vpop.f32.mrf.mxu0
      %v485 = vadd.f32 0.0, %v484
      %v486 = vpop.f32.mrf.mxu0
      %487 = vmatprep.mubr.f32.mxu0 0.0
      %488 = vmatmul.mubr.f32.gmra.mxu0 %v284
      %v489 = vpop.f32.mrf.mxu0
      %v490 = vadd.f32 0.0, %v489
      %v491 = vpop.f32.mrf.mxu0
      %492 = vmatprep.mubr.f32.mxu0 0.0
      %493 = vmatmul.mubr.f32.gmra.mxu0 %v287
      %v494 = vpop.f32.mrf.mxu0
      %v495 = vadd.f32 0.0, %v494
      %v496 = vpop.f32.mrf.mxu0
      %497 = vmatprep.mubr.f32.mxu0 0.0
      %498 = vmatmul.mubr.f32.gmra.mxu0 %v290
      %v499 = vpop.f32.mrf.mxu0
      %v500 = vadd.f32 0.0, %v499
      %v501 = vpop.f32.mrf.mxu0
      %502 = vmatprep.mubr.f32.mxu0 0.0
      %503 = vmatmul.mubr.f32.gmra.mxu0 %v293
      %v504 = vpop.f32.mrf.mxu0
      %v505 = vadd.f32 0.0, %v504
      %v506 = vpop.f32.mrf.mxu0
      %507 = vmatprep.mubr.f32.mxu0 0.0
      %508 = vmatmul.mubr.f32.gmra.mxu0 %v296
      %v509 = vpop.f32.mrf.mxu0
      %v510 = vadd.f32 0.0, %v509
      %v511 = vpop.f32.mrf.mxu0
      %512 = vmatprep.mubr.f32.mxu0 0.0
      %513 = vmatmul.mubr.f32.gmra.mxu0 %v299
      %v514 = vpop.f32.mrf.mxu0
      %v515 = vadd.f32 0.0, %v514
      %v516 = vpop.f32.mrf.mxu0
      %517 = vmatprep.mubr.f32.mxu0 0.0
      %518 = vmatmul.mubr.f32.gmra.mxu0 %v302
      %v519 = vpop.f32.mrf.mxu0
      %v520 = vadd.f32 0.0, %v519
      %v521 = vpop.f32.mrf.mxu0
      %522 = vmatprep.mubr.f32.mxu0 0.0
      %523 = vmatmul.mubr.f32.gmra.mxu0 %v305
      %v524 = vpop.f32.mrf.mxu0
      %v525 = vadd.f32 0.0, %v524
      %v526 = vpop.f32.mrf.mxu0
      %527 = vmatprep.mubr.f32.mxu0 0.0
      %528 = vmatmul.mubr.f32.gmra.mxu0 %v308
      %v529 = vpop.f32.mrf.mxu0
      %v530 = vadd.f32 0.0, %v529
      %v531 = vpop.f32.mrf.mxu0
      %532 = vmatprep.mubr.f32.mxu0 0.0
      %533 = vmatmul.mubr.f32.gmra.mxu0 %v311
      %v534 = vpop.f32.mrf.mxu0
      %v535 = vadd.f32 0.0, %v534
      %v536 = vpop.f32.mrf.mxu0
      %537 = vmatprep.mubr.f32.mxu0 0.0
      %538 = vmatmul.mubr.f32.gmra.mxu0 %v314
      %v539 = vpop.f32.mrf.mxu0
      %v540 = vadd.f32 0.0, %v539
      %v541 = vpop.f32.mrf.mxu0
      %542 = vmatprep.mubr.f32.mxu0 0.0
      %543 = vmatmul.mubr.f32.gmra.mxu0 %v317
      %v544 = vpop.f32.mrf.mxu0
      %v545 = vadd.f32 0.0, %v544
      %v546 = vpop.f32.mrf.mxu0
      %547 = vdwg.mxu0
      %548 = vst [vmem:[%s179] sm:$0xff] %v390
      %549 = vst [vmem:[%s179 + $0x8] sm:$0xff] %v395
      %550 = vst [vmem:[%s179 + $0x10] sm:$0xff] %v400
      %551 = vst [vmem:[%s179 + $0x18] sm:$0xff] %v405
      %552 = vst [vmem:[%s179 + $0x20] sm:$0xff] %v410
      %553 = vst [vmem:[%s179 + $0x28] sm:$0xff] %v415
      %554 = vst [vmem:[%s179 + $0x30] sm:$0xff] %v420
      %555 = vst [vmem:[%s179 + $0x38] sm:$0xff] %v425
      %556 = vst [vmem:[%s179 + $0x40] sm:$0xff] %v430
      %557 = vst [vmem:[%s179 + $0x48] sm:$0xff] %v435
      %558 = vst [vmem:[%s179 + $0x50] sm:$0xff] %v440
      %559 = vst [vmem:[%s179 + $0x58] sm:$0xff] %v445
      %560 = vst [vmem:[%s179 + $0x60] sm:$0xff] %v450
      %561 = vst [vmem:[%s179 + $0x68] sm:$0xff] %v455
      %562 = vst [vmem:[%s179 + $0x70] sm:$0xff] %v460
      %563 = vst [vmem:[%s179 + $0x78] sm:$0xff] %v465
      %564 = vst [vmem:[%s179 + $0x80] sm:$0xff] %v470
      %565 = vst [vmem:[%s179 + $0x88] sm:$0xff] %v475
      %566 = vst [vmem:[%s179 + $0x90] sm:$0xff] %v480
      %567 = vst [vmem:[%s179 + $0x98] sm:$0xff] %v485
      %568 = vst [vmem:[%s179 + $0xa0] sm:$0xff] %v490
      %569 = vst [vmem:[%s179 + $0xa8] sm:$0xff] %v495
      %570 = vst [vmem:[%s179 + $0xb0] sm:$0xff] %v500
      %571 = vst [vmem:[%s179 + $0xb8] sm:$0xff] %v505
      %572 = vst [vmem:[%s179 + $0xc0] sm:$0xff] %v510
      %573 = vst [vmem:[%s179 + $0xc8] sm:$0xff] %v515
      %574 = vst [vmem:[%s179 + $0xd0] sm:$0xff] %v520
      %575 = vst [vmem:[%s179 + $0xd8] sm:$0xff] %v525
      %576 = vst [vmem:[%s179 + $0xe0] sm:$0xff] %v530
      %577 = vst [vmem:[%s179 + $0xe8] sm:$0xff] %v535
      %578 = vst [vmem:[%s179 + $0xf0] sm:$0xff] %v540
      %579 = vst [vmem:[%s179 + $0xf8] sm:$0xff] %v545
      %v580 = vadd.f32 %v390, %v395
      %v581 = vadd.f32 %v580, %v400
      %v582 = vadd.f32 %v581, %v405
      %v583 = vadd.f32 %v582, %v410
      %v584 = vadd.f32 %v583, %v415
      %v585 = vadd.f32 %v584, %v420
      %v586 = vadd.f32 %v585, %v425
      %v587 = vadd.f32 %v586, %v430
      %v588 = vadd.f32 %v587, %v435
      %v589 = vadd.f32 %v588, %v440
      %v590 = vadd.f32 %v589, %v445
      %v591 = vadd.f32 %v590, %v450
      %v592 = vadd.f32 %v591, %v455
      %v593 = vadd.f32 %v592, %v460
      %v594 = vadd.f32 %v593, %v465
      %v595 = vadd.f32 %v594, %v470
      %v596 = vadd.f32 %v595, %v475
      %v597 = vadd.f32 %v596, %v480
      %v598 = vadd.f32 %v597, %v485
      %v599 = vadd.f32 %v598, %v490
      %v600 = vadd.f32 %v599, %v495
      %v601 = vadd.f32 %v600, %v500
      %v602 = vadd.f32 %v601, %v505
      %v603 = vadd.f32 %v602, %v510
      %v604 = vadd.f32 %v603, %v515
      %v605 = vadd.f32 %v604, %v520
      %v606 = vadd.f32 %v605, %v525
      %v607 = vadd.f32 %v606, %v530
      %v608 = vadd.f32 %v607, %v535
      %v609 = vadd.f32 %v608, %v540
      %v610 = vadd.f32 %v609, %v545
      %v611 = vrot.slane %v610, 4
      %v612 = vadd.f32 %v610, %v611
      %v613 = vrot.slane %v612, 2
      %v614 = vadd.f32 %v612, %v613
      %v615 = vrot.slane %v614, 1
      %v616 = vadd.f32 %v614, %v615
      %v617 = vmul.f32 %v390, %v390
      %v618 = vmul.f32 %v395, %v395
      %v619 = vmul.f32 %v400, %v400
      %v620 = vmul.f32 %v405, %v405
      %v621 = vmul.f32 %v410, %v410
      %v622 = vmul.f32 %v415, %v415
      %v623 = vmul.f32 %v420, %v420
      %v624 = vmul.f32 %v425, %v425
      %v625 = vmul.f32 %v430, %v430
      %v626 = vmul.f32 %v435, %v435
      %v627 = vmul.f32 %v440, %v440
      %v628 = vmul.f32 %v445, %v445
      %v629 = vmul.f32 %v450, %v450
      %v630 = vmul.f32 %v455, %v455
      %v631 = vmul.f32 %v460, %v460
      %v632 = vmul.f32 %v465, %v465
      %v633 = vmul.f32 %v470, %v470
      %v634 = vmul.f32 %v475, %v475
      %v635 = vmul.f32 %v480, %v480
      %v636 = vmul.f32 %v485, %v485
      %v637 = vmul.f32 %v490, %v490
      %v638 = vmul.f32 %v495, %v495
      %v639 = vmul.f32 %v500, %v500
      %v640 = vmul.f32 %v505, %v505
      %v641 = vmul.f32 %v510, %v510
      %v642 = vmul.f32 %v515, %v515
      %v643 = vmul.f32 %v520, %v520
      %v644 = vmul.f32 %v525, %v525
      %v645 = vmul.f32 %v530, %v530
      %v646 = vmul.f32 %v535, %v535
      %v647 = vmul.f32 %v540, %v540
      %v648 = vmul.f32 %v545, %v545
      %v649 = vadd.f32 %v617, %v618
      %v650 = vadd.f32 %v649, %v619
      %v651 = vadd.f32 %v650, %v620
      %v652 = vadd.f32 %v651, %v621
      %v653 = vadd.f32 %v652, %v622
      %v654 = vadd.f32 %v653, %v623
      %v655 = vadd.f32 %v654, %v624
      %v656 = vadd.f32 %v655, %v625
      %v657 = vadd.f32 %v656, %v626
      %v658 = vadd.f32 %v657, %v627
      %v659 = vadd.f32 %v658, %v628
      %v660 = vadd.f32 %v659, %v629
      %v661 = vadd.f32 %v660, %v630
      %v662 = vadd.f32 %v661, %v631
      %v663 = vadd.f32 %v662, %v632
      %v664 = vadd.f32 %v663, %v633
      %v665 = vadd.f32 %v664, %v634
      %v666 = vadd.f32 %v665, %v635
      %v667 = vadd.f32 %v666, %v636
      %v668 = vadd.f32 %v667, %v637
      %v669 = vadd.f32 %v668, %v638
      %v670 = vadd.f32 %v669, %v639
      %v671 = vadd.f32 %v670, %v640
      %v672 = vadd.f32 %v671, %v641
      %v673 = vadd.f32 %v672, %v642
      %v674 = vadd.f32 %v673, %v643
      %v675 = vadd.f32 %v674, %v644
      %v676 = vadd.f32 %v675, %v645
      %v677 = vadd.f32 %v676, %v646
      %v678 = vadd.f32 %v677, %v647
      %v679 = vadd.f32 %v678, %v648
      %v680 = vrot.slane %v679, 4
      %v681 = vadd.f32 %v679, %v680
      %v682 = vrot.slane %v681, 2
      %v683 = vadd.f32 %v681, %v682
      %v684 = vrot.slane %v683, 1
      %v685 = vadd.f32 %v683, %v684
      %vm686 = vcmask 1040384
      %v687 = vsel %vm686, %v616, %v685
      %vm688 = vcmask 1041408
      %v689 = vsel %vm688, %v687, 0.0
      %690 = vst [vmem:[%s184] sm:$0xff] %v689
      %s691 = smul.u32 32, %s15
      %p692 = scmp.lt.s32.totalorder %s691, 63
      %s693 = scalar_select %p692, %s691, 63
      %s694 = smul.addr %s693, 8
      %s695 = scalar_lea.vmem %s2, %s694
      %p696 = scmp.lt.s32.totalorder %s15, 1
      %s697 = scalar_select %p696, %s15, 1
      %s698 = smul.addr %s697, 8
      %s699 = scalar_lea.vmem %s3, %s698
      // Predicated region
      $region29: #{aspp_module_forward.2} parent=27 // pred_check
        %p700 = pneg %p80
      $region30: #{aspp_module_forward.2} parent=27 // pred_check_branch
        %702 = sbr.rel (%p700) target = $region32
      $region31: #{aspp_module_forward.2} parent=27 // pred_region
        %s703 = smul.u32 32, %s15
      $region32: #{aspp_module_forward.2} parent=27 // pred_fallthru
        _
      // Predicated region
      $region33: #{aspp_module_forward.2} parent=27 // pred_check
        %p704 = pneg %p106
      $region34: #{aspp_module_forward.2} parent=27 // pred_check_branch
        %706 = sbr.rel (%p704) target = $region36
      $region35: #{aspp_module_forward.2} parent=27 // pred_region
        _
      $region36: #{aspp_module_forward.2} parent=27 // pred_fallthru
        _
    $region28: #{aspp_module_forward.2} parent=5 // pred_fallthru
      _
    %p707 = scmp.le.s32.totalorder 2, %s10
    // Predicated region
    $region37: #{aspp_module_forward.2} parent=5 // pred_check
      %p708 = pneg %p707
    $region38: #{aspp_module_forward.2} parent=5 // pred_check_branch
      %710 = sbr.rel (%p708) target = $region40
    $region39: #{aspp_module_forward.2} parent=5 // pred_region
      %s711 = ssub.s32 %s10, 2
      // Predicated region
      $region41: #{aspp_module_forward.2} parent=39 // pred_check
        %p712 = pneg %p86
      $region42: #{aspp_module_forward.2} parent=39 // pred_check_branch
        %714 = sbr.rel (%p712) target = $region44
      $region43: #{aspp_module_forward.2} parent=39 // pred_region
        %s715 = smul.u32 32, %s16
        %p716 = scmp.lt.s32.totalorder %s715, 63
        %s717 = scalar_select %p716, %s715, 63
        %s718 = smul.addr %s717, 8
        %s719 = scalar_lea.vmem %s2, %s718
      $region44: #{aspp_module_forward.2} parent=39 // pred_fallthru
        _
      // Predicated region
      $region45: #{aspp_module_forward.2} parent=39 // pred_check
        %p720 = pneg %p112
      $region46: #{aspp_module_forward.2} parent=39 // pred_check_branch
        %722 = sbr.rel (%p720) target = $region48
      $region47: #{aspp_module_forward.2} parent=39 // pred_region
        %p723 = scmp.lt.s32.totalorder %s16, 1
        %s724 = scalar_select %p723, %s16, 1
        %s725 = smul.addr %s724, 8
        %s726 = scalar_lea.vmem %s3, %s725
      $region48: #{aspp_module_forward.2} parent=39 // pred_fallthru
        _
    $region40: #{aspp_module_forward.2} parent=5 // pred_fallthru
      _
  $region6: #{aspp_module_forward.2} parent=0 // loop_footer
    %s14 = sadd.s32 1, %s10
  $region7: #{aspp_module_forward.2} parent=0 // loop_footer_branch
    %9 = sbr.rel target = $region3
  $region8: #{aspp_module_forward.2} parent=0 // loop_exit
    _

</llo_original>
